<compile_context>
chip_gen: v5e
topology: v5e:2x2
jax: 0.10.0
libtpu: 0.0.40
codegen_flags: <defaults>
</compile_context>

<pallas_src>
import math

import jax
import jax.numpy as jnp
from jax import lax
from jax.experimental import pallas as pl
from jax.experimental.pallas import tpu as pltpu


def _lora_linear_kernel(x_ref, w_ref, xa_ref, bT_ref, bias_ref, o_ref, acc_ref):
    k = pl.program_id(2)

    @pl.when(k == 0)
    def _init():
        acc_ref[...] = jnp.zeros_like(acc_ref)

    # Base path: x(tm,tk) contracted against W(tn,tk) along K — the (out, in)
    # weight layout is consumed as-is (transposed-RHS matmul on the MXU).
    acc_ref[...] += lax.dot_general(
        x_ref[...], w_ref[...], (((1,), (1,)), ((), ())),
        preferred_element_type=jnp.float32)

    @pl.when(k == pl.num_programs(2) - 1)
    def _finalize():
        # LoRA second stage: (tm, r) @ (r, tn), all f32, once per (i, j) tile.
        lora = jnp.dot(xa_ref[...], bT_ref[...],
                       preferred_element_type=jnp.float32)
        o_ref[...] = (acc_ref[...] + lora + bias_ref[...]).astype(o_ref.dtype)


def _round_up(x, m):
    return ((x + m - 1) // m) * m


def _sublane_align(dtype):
    # Sub-32-bit dtypes pack along sublanes: 8 rows f32, 16 bf16, 32 int8/fp8.
    return max(8, 32 // jnp.dtype(dtype).itemsize)


def _pick_tile(dim, target, aligns):
    """Tile <= target aligned to one of `aligns` (coarsest preferred).

    Prefers an exact divisor of `dim` (no padding).  If none exists, returns
    an aligned tile and the caller zero-pads the operand to a tile multiple.
    A dim <= target is used as one full-extent block (always legal)."""
    if dim <= target:
        return dim
    for align in aligns:
        t = (target // align) * align
        s = t
        while s >= align:
            if dim % s == 0:
                return s
            s -= align
    for align in aligns:
        t = (target // align) * align
        if t >= align:
            return t
    return aligns[-1]


def dynamic_lora_linear(x, weight, lora_A, lora_B, bias, lora_alpha, r_max,
                        rank=None, *, tm=512, tn=1024, tk=1024):
    """Pallas implementation of DynamicLoRALinear.forward.

    x:       (..., in_features)
    weight:  (out_features, in_features)   -- used untransposed
    lora_A:  (r_max, in_features)
    lora_B:  (out_features, r_max)
    bias:    (out_features,) or None
    """
    if rank is None:
        rank = r_max
    orig_shape = x.shape
    in_features = orig_shape[-1]
    out_features = weight.shape[0]
    x2 = x.reshape(-1, in_features)
    M, K, N = x2.shape[0], in_features, out_features
    scaling = float(lora_alpha) / float(r_max)

    # Dynamic-rank truncation == zero-masking rows of A beyond `rank`
    # (columns of B past `rank` only ever multiply those zeroed rows).
    # `scaling` is folded in here too; both ops touch only the tiny LoRA
    # matrices, never the big weight.
    row_ids = jnp.arange(r_max)[:, None]
    aT = jnp.where(row_ids < rank, scaling * lora_A, 0.0).astype(x2.dtype).T  # (K, r)

    # LoRA first stage hoisted out of the kernel (perf review): the 8-wide
    # output of x @ A^T would waste a full 128/256-lane MXU result block on
    # every (i, j, k) step and be recomputed for every N tile.
    xa = jnp.dot(x2, aT, preferred_element_type=jnp.float32)   # (M, r_max) f32
    bT = lora_B.astype(jnp.float32).T                           # (r_max, N) f32

    if bias is None:
        bias2d = jnp.zeros((1, N), jnp.float32)
    else:
        bias2d = bias.reshape(1, N).astype(jnp.float32)

    sub = _sublane_align(x2.dtype)
    tm = _pick_tile(M, tm, (sub,))
    tn = _pick_tile(N, tn, (256, 128))   # lane-dense output; MXU 2x256^2 friendly
    tk = _pick_tile(K, tk, (256, 128))

    # Zero-pad ragged dims to tile multiples: K padding contributes zero,
    # padded M rows / N cols are sliced off the output.  (Only materializes a
    # padded copy when a dim is actually ragged.)
    Mp, Np, Kp = _round_up(M, tm), _round_up(N, tn), _round_up(K, tk)
    x2p = x2 if (Mp, Kp) == (M, K) else jnp.pad(x2, ((0, Mp - M), (0, Kp - K)))
    weight_p = weight if (Np, Kp) == (N, K) else jnp.pad(
        weight, ((0, Np - N), (0, Kp - K)))
    xa_p = xa if Mp == M else jnp.pad(xa, ((0, Mp - M), (0, 0)))
    bT_p = bT if Np == N else jnp.pad(bT, ((0, 0), (0, Np - N)))
    bias_p = bias2d if Np == N else jnp.pad(bias2d, ((0, 0), (0, Np - N)))

    grid = (Mp // tm, Np // tn, Kp // tk)

    # Advisory cost estimate — bytes account for per-tile re-reads of x and W.
    x_it = jnp.dtype(x2.dtype).itemsize
    w_it = jnp.dtype(weight.dtype).itemsize
    flops = 2.0 * M * K * N + 2.0 * M * r_max * N
    bytes_accessed = (x2p.size * x_it * grid[1]          # x read once per N tile
                      + weight_p.size * w_it * grid[0]   # W read once per M tile
                      + xa_p.size * 4 * grid[1]
                      + bT_p.size * 4 + bias_p.size * 4
                      + Mp * Np * x_it)                   # output written once
    cost = pl.CostEstimate(flops=int(flops), transcendentals=0,
                           bytes_accessed=int(bytes_accessed))

    # VMEM budget: double-buffered x/W/out + resident LoRA inputs + f32 acc.
    est = (2 * tm * tk * x_it          # x
           + 2 * tn * tk * w_it        # W
           + 2 * tm * tn * x_it        # out
           + 2 * tm * r_max * 4        # xa
           + 2 * r_max * tn * 4        # B^T
           + 2 * tn * 4                # bias
           + tm * tn * 4)              # accumulator scratch
    try:
        vmem_cap = pltpu.get_tpu_info().vmem_capacity_bytes
    except Exception:
        vmem_cap = 64 << 20            # assume the smallest (v7x per-TC) VMEM
    hard_cap = min(48 << 20, int(0.55 * vmem_cap))
    vmem_limit = None
    if est > 12 << 20:
        vmem_limit = min(int(1.5 * est) + (4 << 20), hard_cap)

    out2 = pl.pallas_call(
        _lora_linear_kernel,
        out_shape=jax.ShapeDtypeStruct((Mp, Np), x2.dtype),
        grid_spec=pltpu.PrefetchScalarGridSpec(
            num_scalar_prefetch=0,
            grid=grid,
            in_specs=[
                pl.BlockSpec((tm, tk), lambda i, j, k: (i, k)),      # x tile
                pl.BlockSpec((tn, tk), lambda i, j, k: (j, k)),      # W (out,in) tile
                pl.BlockSpec((tm, r_max), lambda i, j, k: (i, 0)),   # xa (f32, resident)
                pl.BlockSpec((r_max, tn), lambda i, j, k: (0, j)),   # B^T (f32, K-resident)
                pl.BlockSpec((1, tn), lambda i, j, k: (0, j)),       # bias per-N tile
            ],
            out_specs=pl.BlockSpec((tm, tn), lambda i, j, k: (i, j)),
            scratch_shapes=[
                pltpu.VMEM((tm, tn), jnp.float32),   # base+LoRA accumulator
            ],
        ),
        compiler_params=pltpu.CompilerParams(
            dimension_semantics=("parallel", "parallel", "arbitrary"),
            vmem_limit_bytes=vmem_limit),
        cost_estimate=cost,
    )(x2p, weight_p, xa_p, bT_p, bias_p)

    out2 = out2[:M, :N]
    return out2.reshape(*orig_shape[:-1], N)


def _reference(x2d, weight, lora_A, lora_B, bias, lora_alpha, r_max, rank):
    scaling = lora_alpha / r_max
    result = x2d @ weight.T + (0.0 if bias is None else bias)
    if rank > 0:
        delta = scaling * (lora_B[:, :rank] @ lora_A[:rank, :])
        result = result + x2d @ delta.T
    return result


if __name__ == "__main__":
    # Small shapes consistent with the module: (batch=2, seq=8, hidden=256).
    in_features = 256
    out_features = 256
    r_max = 8
    lora_alpha = 16
    batch, seq = 2, 8
    rank = 4  # dynamic rank < r_max

    key = jax.random.PRNGKey(0)
    k_x, k_a, k_b, k_w = jax.random.split(key, 4)

    x = jax.random.normal(k_x, (batch, seq, in_features), jnp.float32)
    lora_A = 0.01 * jax.random.normal(k_a, (r_max, in_features), jnp.float32)
    lora_B = 0.01 * jax.random.normal(k_b, (out_features, r_max), jnp.float32)
    # kaiming_uniform_(a=sqrt(5)) -> U(-bound, bound), bound = 1/sqrt(in_features)
    bound = 1.0 / math.sqrt(in_features)
    weight = jax.random.uniform(k_w, (out_features, in_features), jnp.float32,
                                minval=-bound, maxval=bound)
    bias = jnp.zeros((out_features,), jnp.float32)

    ref = _reference(x.reshape(-1, in_features), weight, lora_A, lora_B, bias,
                     lora_alpha, r_max, rank).reshape(batch, seq, out_features)

    # 1) Small tiles so the demo exercises the full (M, N, K) tiled path
    #    (grid (2, 2, 2)) including K-accumulation and init/finalize gating.
    out = dynamic_lora_linear(x, weight, lora_A, lora_B, bias,
                              lora_alpha, r_max, rank=rank,
                              tm=8, tn=128, tk=128)
    out = jax.block_until_ready(out)
    assert out.shape == (batch, seq, out_features)
    err = jnp.max(jnp.abs(out - ref))
    assert jnp.allclose(out, ref, atol=1e-4, rtol=1e-4), f"max err {err}"

    # 2) Production defaults (collapse to full-extent blocks at this size).
    out2 = dynamic_lora_linear(x, weight, lora_A, lora_B, bias,
                               lora_alpha, r_max, rank=rank)
    out2 = jax.block_until_ready(out2)
    err2 = jnp.max(jnp.abs(out2 - ref))
    assert jnp.allclose(out2, ref, atol=1e-4, rtol=1e-4), f"max err {err2}"

    print("KERNEL_OK")
</pallas_src>

<mosaic_0001>
module attributes {stable_mosaic.version = 11 : i64} {
  func.func @_lora_linear_kernel(%arg0: i32, %arg1: i32, %arg2: i32, %arg3: memref<8x128xf32, #tpu.memory_space<vmem>>, %arg4: memref<128x128xf32, #tpu.memory_space<vmem>>, %arg5: memref<8x8xf32, #tpu.memory_space<vmem>>, %arg6: memref<8x128xf32, #tpu.memory_space<vmem>>, %arg7: memref<1x128xf32, #tpu.memory_space<vmem>>, %arg8: memref<8x128xf32, #tpu.memory_space<vmem>>, %arg9: memref<8x128xf32, #tpu.memory_space<vmem>>) attributes {dimension_semantics = [#tpu.dimension_semantics<parallel>, #tpu.dimension_semantics<parallel>, #tpu.dimension_semantics<arbitrary>], iteration_bounds = array<i64: 2, 2, 2>, scalar_prefetch = 0 : i64, scratch_operands = 1 : i64, tpu.core_type = #tpu.core_type<tc>, window_params = [{transform_indices = @transform_0, window_bounds = array<i64: 8, 128>}, {transform_indices = @transform_1, window_bounds = array<i64: 128, 128>}, {transform_indices = @transform_2, window_bounds = array<i64: 8, 8>}, {transform_indices = @transform_3, window_bounds = array<i64: 8, 128>}, {transform_indices = @transform_4, window_bounds = array<i64: 1, 128>}, {transform_indices = @transform_5, window_bounds = array<i64: 8, 128>}]} {
    %c0_i32 = arith.constant 0 : i32
    %0 = arith.cmpi eq, %arg2, %c0_i32 : i32
    %1 = arith.extui %0 : i1 to i32
    %c0_i32_0 = arith.constant 0 : i32
    %2 = arith.cmpi ne, %1, %c0_i32_0 : i32
    scf.if %2 {
      %cst_9 = arith.constant 0.000000e+00 : f32
      %12 = vector.broadcast %cst_9 : f32 to vector<8x128xf32>
      %c0_10 = arith.constant 0 : index
      %c0_11 = arith.constant 0 : index
      %13 = vector.load %arg9[%c0_10, %c0_11] : memref<8x128xf32, #tpu.memory_space<vmem>>, vector<8x128xf32>
      tpu.vector_store %arg9[%c0_10, %c0_11], %12 {strides = array<i32>} : memref<8x128xf32, #tpu.memory_space<vmem>>, vector<8x128xf32>,
    } else {
    }
    %c0 = arith.constant 0 : index
    %c0_1 = arith.constant 0 : index
    %3 = vector.load %arg9[%c0, %c0_1] : memref<8x128xf32, #tpu.memory_space<vmem>>, vector<8x128xf32>
    %c0_2 = arith.constant 0 : index
    %c0_3 = arith.constant 0 : index
    %4 = vector.load %arg3[%c0_2, %c0_3] : memref<8x128xf32, #tpu.memory_space<vmem>>, vector<8x128xf32>
    %c0_4 = arith.constant 0 : index
    %c0_5 = arith.constant 0 : index
    %5 = vector.load %arg4[%c0_4, %c0_5] : memref<128x128xf32, #tpu.memory_space<vmem>>, vector<128x128xf32>
    %cst = arith.constant dense<0.000000e+00> : vector<8x128xf32>
    %6 = tpu.matmul %4, %5, %cst {dimension_numbers = #tpu.dot_dimension_numbers<[1], [1], [0], [0], [0, 0, 1, 0], [], []>} : vector<8x128xf32>, vector<128x128xf32>, vector<8x128xf32> -> vector<8x128xf32>
    %7 = arith.addf %3, %6 : vector<8x128xf32>
    %c0_6 = arith.constant 0 : index
    %c0_7 = arith.constant 0 : index
    %8 = vector.load %arg9[%c0_6, %c0_7] : memref<8x128xf32, #tpu.memory_space<vmem>>, vector<8x128xf32>
    tpu.vector_store %arg9[%c0_6, %c0_7], %7 {strides = array<i32>} : memref<8x128xf32, #tpu.memory_space<vmem>>, vector<8x128xf32>,
    %c1_i32 = arith.constant 1 : i32
    %9 = arith.cmpi eq, %arg2, %c1_i32 : i32
    %10 = arith.extui %9 : i1 to i32
    %c0_i32_8 = arith.constant 0 : i32
    %11 = arith.cmpi ne, %10, %c0_i32_8 : i32
    scf.if %11 {
      %c0_9 = arith.constant 0 : index
      %c0_10 = arith.constant 0 : index
      %12 = vector.load %arg5[%c0_9, %c0_10] : memref<8x8xf32, #tpu.memory_space<vmem>>, vector<8x8xf32>
      %c0_11 = arith.constant 0 : index
      %c0_12 = arith.constant 0 : index
      %13 = vector.load %arg6[%c0_11, %c0_12] : memref<8x128xf32, #tpu.memory_space<vmem>>, vector<8x128xf32>
      %cst_13 = arith.constant dense<0.000000e+00> : vector<8x128xf32>
      %14 = tpu.matmul %12, %13, %cst_13 {dimension_numbers = #tpu.dot_dimension_numbers<[1], [0], [0], [1], [0, 0, 1, 1], [], []>} : vector<8x8xf32>, vector<8x128xf32>, vector<8x128xf32> -> vector<8x128xf32>
      %c0_14 = arith.constant 0 : index
      %c0_15 = arith.constant 0 : index
      %15 = vector.load %arg9[%c0_14, %c0_15] : memref<8x128xf32, #tpu.memory_space<vmem>>, vector<8x128xf32>
      %16 = arith.addf %15, %14 : vector<8x128xf32>
      %c0_16 = arith.constant 0 : index
      %c0_17 = arith.constant 0 : index
      %17 = vector.load %arg7[%c0_16, %c0_17] : memref<1x128xf32, #tpu.memory_space<vmem>>, vector<1x128xf32>
      %18 = vector.broadcast %17 : vector<1x128xf32> to vector<8x128xf32>
      %19 = arith.addf %16, %18 : vector<8x128xf32>
      %c0_18 = arith.constant 0 : index
      %c0_19 = arith.constant 0 : index
      %20 = vector.load %arg8[%c0_18, %c0_19] : memref<8x128xf32, #tpu.memory_space<vmem>>, vector<8x128xf32>
      tpu.vector_store %arg8[%c0_18, %c0_19], %19 {strides = array<i32>} : memref<8x128xf32, #tpu.memory_space<vmem>>, vector<8x128xf32>,
    } else {
    }
    return
  }
  func.func @transform_0(%arg0: i32, %arg1: i32, %arg2: i32) -> (i32, i32) {
    %c0_i32 = arith.constant 0 : i32
    return %arg0, %arg2 : i32, i32
  }
  func.func @transform_1(%arg0: i32, %arg1: i32, %arg2: i32) -> (i32, i32) {
    %c0_i32 = arith.constant 0 : i32
    return %arg1, %arg2 : i32, i32
  }
  func.func @transform_2(%arg0: i32, %arg1: i32, %arg2: i32) -> (i32, i32) {
    %c0_i32 = arith.constant 0 : i32
    %c0_i32_0 = arith.constant 0 : i32
    return %arg0, %c0_i32 : i32, i32
  }
  func.func @transform_3(%arg0: i32, %arg1: i32, %arg2: i32) -> (i32, i32) {
    %c0_i32 = arith.constant 0 : i32
    %c0_i32_0 = arith.constant 0 : i32
    return %c0_i32, %arg1 : i32, i32
  }
  func.func @transform_4(%arg0: i32, %arg1: i32, %arg2: i32) -> (i32, i32) {
    %c0_i32 = arith.constant 0 : i32
    %c0_i32_0 = arith.constant 0 : i32
    return %c0_i32, %arg1 : i32, i32
  }
  func.func @transform_5(%arg0: i32, %arg1: i32, %arg2: i32) -> (i32, i32) {
    %c0_i32 = arith.constant 0 : i32
    return %arg0, %arg1 : i32, i32
  }
}

</mosaic_0001>

<llo_original>
// kernel: tpu_custom_call.1
$region0: #{tpu_custom_call.1}
  #allocation0 [shape = 'u32[]', space=smem, size = 0x4, offset = 0x4, fixed_abs, tag = 'smem constant byte address 0x4 - core index']
  #allocation1 [shape = 'u32[72,128]{1,0:T(1,128)}', space=vmem, size = 0x9000, scoped, tag = 'internal scratch']
  #allocation2 [shape = 'f32[8,128]{1,0:T(8,128)}', space=vmem, size = 0x1000, scoped, tag = 'scratch operand']
  %s0 = inlined_call_operand.hbm [shape: f32[16,256], index: 0, kind: input, shape index: {}]
  %s1 = inlined_call_operand.hbm [shape: f32[256,256], index: 1, kind: input, shape index: {}]
  %s2 = inlined_call_operand.vmem [shape: f32[16,8], index: 2, kind: input, shape index: {}]
  %s3 = inlined_call_operand.vmem [shape: f32[8,256], index: 3, kind: input, shape index: {}]
  %s4 = inlined_call_operand.vmem [shape: f32[1,256], index: 4, kind: input, shape index: {}]
  %s5 = inlined_call_operand.hbm [shape: f32[16,256], index: 5, kind: output, shape index: {}]
  %s6 = sld [smem:[#allocation0]]
  $region69: #{tpu_custom_call.1} parent=0
    _
  %s8 = ssub.s32 1, %s6
  %s9 = scalar_select 0, %s8, %s6
  $region1: #{tpu_custom_call.1} parent=0
    #allocation3 [shape = 'u8[8192]{0}', space=vmem, size = 0x2000, scoped, tag = 'input window, operand 0']
    #allocation4 [shape = 's32[2]{0}', space=sflag, size = 0x8, scoped, tag = 'scoped memory for tpu_custom_call.1']
    #allocation5 [shape = 's32[2]{0}', space=sflag, size = 0x8, scoped, tag = 'scoped memory for tpu_custom_call.1']
    #allocation6 [shape = 'u8[131072]{0}', space=vmem, size = 0x20000, scoped, tag = 'input window, operand 1']
    #allocation7 [shape = 's32[2]{0}', space=sflag, size = 0x8, scoped, tag = 'scoped memory for tpu_custom_call.1']
    #allocation8 [shape = 'u8[8192]{0}', space=vmem, size = 0x2000, scoped, tag = 'output window, operand 0']
    %10 = vsyncpa [#allocation4], 0
    %s11 = scalar_lea.sflag [#allocation4], 1
    %12 = vsyncpa %s11, 0
    %13 = vsyncpa [#allocation7], 0
    %s14 = scalar_lea.sflag [#allocation7], 1
    %15 = vsyncpa %s14, 0
    %16 = vsyncpa [#allocation5], 0
    %s17 = scalar_lea.sflag [#allocation5], 1
    %18 = vsyncpa %s17, 0
    loop: start=0, step=1, limit=10
    $region2: #{tpu_custom_call.1} parent=1 // loop_pre_header
      _
    $region3: #{tpu_custom_call.1} parent=1 // loop_header
      %s20 = sphi 0, %s24
      %p21 = scmp.ge.s32.totalorder %s20, 10
      %s27 = sphi 0, %s46
      %s28 = sphi 0, %s42
      %s29 = sphi 0, %s38
      %s30 = sphi 0, %s27
      %s31 = sphi 0, %s28
      %s32 = sphi 0, %s29
      %s33 = sphi 0, %s30
      %s34 = sphi 0, %s31
      %s35 = sphi 0, %s32
      %s51 = sphi 0, %s53
      %s54 = sphi 0, %s51
      %s55 = sphi 0, %s54
      %s71 = sphi 0, %s55
      %s79 = sphi 0, %s81
      %s82 = sphi 0, %s79
      %s83 = sphi 0, %s82
      %s99 = sphi 0, %s83
      %s105 = sphi 0, %s107
      %s108 = sphi 0, %s105
      %s109 = sphi 0, %s108
      %s125 = sphi 0, %s109
      %s131 = sphi 0, %s133
      %s134 = sphi 0, %s131
      %s135 = sphi 0, %s134
      %s151 = sphi 0, %s135
      %s157 = sphi 0, %s159
      %s160 = sphi 0, %s157
      %s161 = sphi 0, %s160
      %s177 = sphi 0, %s161
      %s185 = sphi 0, %s187
      %s188 = sphi 0, %s185
      %s189 = sphi 0, %s188
      %s205 = sphi 0, %s189
    $region4: #{tpu_custom_call.1} parent=1 // loop_header_branch
      %23 = sbr.rel (%p21) target = $region8
    $region5: #{tpu_custom_call.1} parent=1 // loop_body
      %s25 = ssub.s32 %s20, 1
      %s26 = ssub.s32 %s20, 2
      %s36 = sadd.s32 1, %s29
      %p37 = scmp.ge.s32.totalorder %s36, 2
      %s38 = scalar_select %p37, 0, %s36
      %s39 = sadd.s32 1, %s28
      %s40 = scalar_select %p37, %s39, %s28
      %p41 = scmp.ge.s32.totalorder %s40, 2
      %s42 = scalar_select %p41, 0, %s40
      %s43 = sadd.s32 1, %s27
      %s44 = scalar_select %p41, %s43, %s27
      %p45 = scmp.ge.s32.totalorder %s44, 2
      %s46 = scalar_select %p45, 0, %s44
      %s47 = ssub.s32 %s27, %s46
      %s48 = ssub.s32 %s29, %s38
      %s49 = sor.u32 %s47, %s48
      %p50 = scmp.eq.s32.totalorder %s49, 0
      %s52 = sadd.s32 %s51, 1
      %s53 = scalar_select %p50, %s51, %s52
      %p56 = pneg %p50
      %p57 = scmp.eq.s32.totalorder %s20, 7
      %p58 = por %p56, %p57
      %p59 = scmp.ne.s32.totalorder %s51, %s54
      %p60 = scmp.eq.s32.totalorder %s20, 0
      %p61 = por %p59, %p60
      %p62 = scmp.ne.s32.totalorder %s51, %s54
      %p63 = scmp.eq.s32.totalorder %s25, 7
      %p64 = por %p62, %p63
      %p65 = scmp.ne.s32.totalorder %s54, %s55
      %p66 = scmp.eq.s32.totalorder %s25, 0
      %p67 = por %p65, %p66
      %p68 = scmp.ne.s32.totalorder %s54, %s55
      %p69 = scmp.eq.s32.totalorder %s26, 7
      %p70 = por %p68, %p69
      %p72 = scmp.ne.s32.totalorder %s55, %s71
      %p73 = scmp.eq.s32.totalorder %s26, 0
      %p74 = por %p72, %p73
      %s75 = ssub.s32 %s28, %s42
      %s76 = ssub.s32 %s29, %s38
      %s77 = sor.u32 %s75, %s76
      %p78 = scmp.eq.s32.totalorder %s77, 0
      %s80 = sadd.s32 %s79, 1
      %s81 = scalar_select %p78, %s79, %s80
      %p84 = pneg %p78
      %p85 = scmp.eq.s32.totalorder %s20, 7
      %p86 = por %p84, %p85
      %p87 = scmp.ne.s32.totalorder %s79, %s82
      %p88 = scmp.eq.s32.totalorder %s20, 0
      %p89 = por %p87, %p88
      %p90 = scmp.ne.s32.totalorder %s79, %s82
      %p91 = scmp.eq.s32.totalorder %s25, 7
      %p92 = por %p90, %p91
      %p93 = scmp.ne.s32.totalorder %s82, %s83
      %p94 = scmp.eq.s32.totalorder %s25, 0
      %p95 = por %p93, %p94
      %p96 = scmp.ne.s32.totalorder %s82, %s83
      %p97 = scmp.eq.s32.totalorder %s26, 7
      %p98 = por %p96, %p97
      %p100 = scmp.ne.s32.totalorder %s83, %s99
      %p101 = scmp.eq.s32.totalorder %s26, 0
      %p102 = por %p100, %p101
      %s103 = ssub.s32 %s27, %s46
      %p104 = scmp.eq.s32.totalorder %s103, 0
      %s106 = sadd.s32 %s105, 1
      %s107 = scalar_select %p104, %s105, %s106
      %p110 = pneg %p104
      %p111 = scmp.eq.s32.totalorder %s20, 7
      %p112 = por %p110, %p111
      %p113 = scmp.ne.s32.totalorder %s105, %s108
      %p114 = scmp.eq.s32.totalorder %s20, 0
      %p115 = por %p113, %p114
      %p116 = scmp.ne.s32.totalorder %s105, %s108
      %p117 = scmp.eq.s32.totalorder %s25, 7
      %p118 = por %p116, %p117
      %p119 = scmp.ne.s32.totalorder %s108, %s109
      %p120 = scmp.eq.s32.totalorder %s25, 0
      %p121 = por %p119, %p120
      %p122 = scmp.ne.s32.totalorder %s108, %s109
      %p123 = scmp.eq.s32.totalorder %s26, 7
      %p124 = por %p122, %p123
      %p126 = scmp.ne.s32.totalorder %s109, %s125
      %p127 = scmp.eq.s32.totalorder %s26, 0
      %p128 = por %p126, %p127
      %s129 = ssub.s32 %s28, %s42
      %p130 = scmp.eq.s32.totalorder %s129, 0
      %s132 = sadd.s32 %s131, 1
      %s133 = scalar_select %p130, %s131, %s132
      %p136 = pneg %p130
      %p137 = scmp.eq.s32.totalorder %s20, 7
      %p138 = por %p136, %p137
      %p139 = scmp.ne.s32.totalorder %s131, %s134
      %p140 = scmp.eq.s32.totalorder %s20, 0
      %p141 = por %p139, %p140
      %p142 = scmp.ne.s32.totalorder %s131, %s134
      %p143 = scmp.eq.s32.totalorder %s25, 7
      %p144 = por %p142, %p143
      %p145 = scmp.ne.s32.totalorder %s134, %s135
      %p146 = scmp.eq.s32.totalorder %s25, 0
      %p147 = por %p145, %p146
      %p148 = scmp.ne.s32.totalorder %s134, %s135
      %p149 = scmp.eq.s32.totalorder %s26, 7
      %p150 = por %p148, %p149
      %p152 = scmp.ne.s32.totalorder %s135, %s151
      %p153 = scmp.eq.s32.totalorder %s26, 0
      %p154 = por %p152, %p153
      %s155 = ssub.s32 %s28, %s42
      %p156 = scmp.eq.s32.totalorder %s155, 0
      %s158 = sadd.s32 %s157, 1
      %s159 = scalar_select %p156, %s157, %s158
      %p162 = pneg %p156
      %p163 = scmp.eq.s32.totalorder %s20, 7
      %p164 = por %p162, %p163
      %p165 = scmp.ne.s32.totalorder %s157, %s160
      %p166 = scmp.eq.s32.totalorder %s20, 0
      %p167 = por %p165, %p166
      %p168 = scmp.ne.s32.totalorder %s157, %s160
      %p169 = scmp.eq.s32.totalorder %s25, 7
      %p170 = por %p168, %p169
      %p171 = scmp.ne.s32.totalorder %s160, %s161
      %p172 = scmp.eq.s32.totalorder %s25, 0
      %p173 = por %p171, %p172
      %p174 = scmp.ne.s32.totalorder %s160, %s161
      %p175 = scmp.eq.s32.totalorder %s26, 7
      %p176 = por %p174, %p175
      %p178 = scmp.ne.s32.totalorder %s161, %s177
      %p179 = scmp.eq.s32.totalorder %s26, 0
      %p180 = por %p178, %p179
      %s181 = ssub.s32 %s27, %s46
      %s182 = ssub.s32 %s28, %s42
      %s183 = sor.u32 %s181, %s182
      %p184 = scmp.eq.s32.totalorder %s183, 0
      %s186 = sadd.s32 %s185, 1
      %s187 = scalar_select %p184, %s185, %s186
      %p190 = pneg %p184
      %p191 = scmp.eq.s32.totalorder %s20, 7
      %p192 = por %p190, %p191
      %p193 = scmp.ne.s32.totalorder %s185, %s188
      %p194 = scmp.eq.s32.totalorder %s20, 0
      %p195 = por %p193, %p194
      %p196 = scmp.ne.s32.totalorder %s185, %s188
      %p197 = scmp.eq.s32.totalorder %s25, 7
      %p198 = por %p196, %p197
      %p199 = scmp.ne.s32.totalorder %s188, %s189
      %p200 = scmp.eq.s32.totalorder %s25, 0
      %p201 = por %p199, %p200
      %p202 = scmp.ne.s32.totalorder %s188, %s189
      %p203 = scmp.eq.s32.totalorder %s26, 7
      %p204 = por %p202, %p203
      %p206 = scmp.ne.s32.totalorder %s189, %s205
      %p207 = scmp.eq.s32.totalorder %s26, 0
      %p208 = por %p206, %p207
      %p209 = scmp.le.s32.totalorder 1, %s20
      %p210 = scmp.lt.s32.totalorder %s20, 9
      %p211 = pnand %p209, %p210
      %p212 = pneg %p211
      // Predicated region
      $region9: #{tpu_custom_call.1} parent=5 // pred_check
        _
      $region10: #{tpu_custom_call.1} parent=5 // pred_check_branch
        %214 = sbr.rel (%p211) target = $region12
      $region11: #{tpu_custom_call.1} parent=5 // pred_region
        %s215 = ssub.s32 %s20, 1
      $region12: #{tpu_custom_call.1} parent=5 // pred_fallthru
        _
      %p216 = scmp.lt.s32.totalorder %s20, 8
      // Predicated region
      $region13: #{tpu_custom_call.1} parent=5 // pred_check
        %p217 = pneg %p216
      $region14: #{tpu_custom_call.1} parent=5 // pred_check_branch
        %219 = sbr.rel (%p217) target = $region16
      $region15: #{tpu_custom_call.1} parent=5 // pred_region
        // Predicated region
        $region17: #{tpu_custom_call.1} parent=15 // pred_check
          %p220 = pneg %p61
        $region18: #{tpu_custom_call.1} parent=15 // pred_check_branch
          %222 = sbr.rel (%p220) target = $region20
        $region19: #{tpu_custom_call.1} parent=15 // pred_region
          %s223 = sand.u32 %s51, 1
          %s224 = scalar_lea.sflag [#allocation4], %s223
          %s225 = sand.u32 %s51, 1
          %s226 = smul.addr %s225, 8
          %s227 = scalar_lea.vmem [#allocation3], %s226
          %229 = vsyncadd %s224, 0
          %s230 = smul.addr %s27, 2
          %s231 = sadd.s32 %s29, %s230
          %s232 = smul.addr %s231, 8
          %s233 = scalar_lea.hbm %s0, %s232
          %s235 = sshll.u32 %s233, 4
          %s236 = int_to_ptr.hbm [resolvable:$true] %s235
          %s237 = sshll.u32 %s227, 4
          %s238 = int_to_ptr.vmem [resolvable:$true] %s237
          %240 = dma.hbm_to_vmem [thread:$0]  %s236, 128, %s238, %s224
        $region20: #{tpu_custom_call.1} parent=15 // pred_fallthru
          _
        // Predicated region
        $region21: #{tpu_custom_call.1} parent=15 // pred_check
          %p241 = pneg %p89
        $region22: #{tpu_custom_call.1} parent=15 // pred_check_branch
          %243 = sbr.rel (%p241) target = $region24
        $region23: #{tpu_custom_call.1} parent=15 // pred_region
          %s244 = sand.u32 %s79, 1
          %s245 = scalar_lea.sflag [#allocation7], %s244
          %s246 = sand.u32 %s79, 1
          %s247 = smul.addr %s246, 128
          %s248 = scalar_lea.vmem [#allocation6], %s247
          %s249 = smul.u32 16, %s28
          %251 = vsyncadd %s245, 0
          %s252 = smul.addr %s249, 2
          %s253 = sadd.s32 %s29, %s252
          %s254 = smul.addr %s253, 8
          %s255 = scalar_lea.hbm %s1, %s254
          %s256 = sshll.u32 %s255, 4
          %s257 = int_to_ptr.hbm [resolvable:$true] %s256
          %s258 = sshll.u32 %s248, 4
          %s259 = int_to_ptr.vmem [resolvable:$true] %s258
          %264 = dma.hbm_to_vmem [thread:$0]  %s257, 2048, %s259, %s245, 256, 128, 8
        $region24: #{tpu_custom_call.1} parent=15 // pred_fallthru
          _
        // Predicated region
        $region25: #{tpu_custom_call.1} parent=15 // pred_check
          %p265 = pneg %p115
        $region26: #{tpu_custom_call.1} parent=15 // pred_check_branch
          %267 = sbr.rel (%p265) target = $region28
        $region27: #{tpu_custom_call.1} parent=15 // pred_region
          %p268 = scmp.lt.s32.totalorder %s27, 1
          %s269 = scalar_select %p268, %s27, 1
          %s270 = smul.addr %s269, 8
          %s271 = scalar_lea.vmem %s2, %s270
        $region28: #{tpu_custom_call.1} parent=15 // pred_fallthru
          _
        // Predicated region
        $region29: #{tpu_custom_call.1} parent=15 // pred_check
          %p272 = pneg %p141
        $region30: #{tpu_custom_call.1} parent=15 // pred_check_branch
          %274 = sbr.rel (%p272) target = $region32
        $region31: #{tpu_custom_call.1} parent=15 // pred_region
          %p275 = scmp.lt.s32.totalorder %s28, 1
          %s276 = scalar_select %p275, %s28, 1
          %s277 = smul.addr %s276, 8
          %s278 = scalar_lea.vmem %s3, %s277
        $region32: #{tpu_custom_call.1} parent=15 // pred_fallthru
          _
        // Predicated region
        $region33: #{tpu_custom_call.1} parent=15 // pred_check
          %p279 = pneg %p167
        $region34: #{tpu_custom_call.1} parent=15 // pred_check_branch
          %281 = sbr.rel (%p279) target = $region36
        $region35: #{tpu_custom_call.1} parent=15 // pred_region
          %p282 = scmp.lt.s32.totalorder %s28, 1
          %s283 = scalar_select %p282, %s28, 1
          %s284 = scalar_lea.vmem %s4, %s283
        $region36: #{tpu_custom_call.1} parent=15 // pred_fallthru
          _
      $region16: #{tpu_custom_call.1} parent=5 // pred_fallthru
        _
      %p285 = scmp.le.s32.totalorder 1, %s20
      %p286 = scmp.lt.s32.totalorder %s20, 9
      %p287 = pnand %p285, %p286
      %p288 = pneg %p287
      // Predicated region
      $region37: #{tpu_custom_call.1} parent=5 // pred_check
        _
      $region38: #{tpu_custom_call.1} parent=5 // pred_check_branch
        %290 = sbr.rel (%p287) target = $region40
      $region39: #{tpu_custom_call.1} parent=5 // pred_region
        %s291 = ssub.s32 %s20, 1
        %s292 = sand.u32 %s54, 1
        %s293 = scalar_lea.sflag [#allocation4], %s292
        %s294 = sand.u32 %s54, 1
        %s295 = smul.addr %s294, 8
        %s296 = scalar_lea.vmem [#allocation3], %s295
        // Predicated region
        $region41: #{tpu_custom_call.1} parent=39 // pred_check
          %p297 = pneg %p67
        $region42: #{tpu_custom_call.1} parent=39 // pred_check_branch
          %299 = sbr.rel (%p297) target = $region44
        $region43: #{tpu_custom_call.1} parent=39 // pred_region
          %301 = dma.done %s293, 128
        $region44: #{tpu_custom_call.1} parent=39 // pred_fallthru
          _
        %s302 = sand.u32 %s82, 1
        %s303 = scalar_lea.sflag [#allocation7], %s302
        %s304 = sand.u32 %s82, 1
        %s305 = smul.addr %s304, 128
        %s306 = scalar_lea.vmem [#allocation6], %s305
        // Predicated region
        $region45: #{tpu_custom_call.1} parent=39 // pred_check
          %p307 = pneg %p95
        $region46: #{tpu_custom_call.1} parent=39 // pred_check_branch
          %309 = sbr.rel (%p307) target = $region48
        $region47: #{tpu_custom_call.1} parent=39 // pred_region
          %311 = dma.done %s303, 2048
        $region48: #{tpu_custom_call.1} parent=39 // pred_fallthru
          _
        %s312 = sand.u32 %s54, 1
        %s313 = scalar_lea.sflag [#allocation4], %s312
        %s314 = sand.u32 %s54, 1
        %s315 = smul.addr %s314, 8
        %s316 = scalar_lea.vmem [#allocation3], %s315
        %p317 = pneg %p67
        %p318 = pneg %p64
        %s319 = sand.u32 %s82, 1
        %s320 = scalar_lea.sflag [#allocation7], %s319
        %s321 = sand.u32 %s82, 1
        %s322 = smul.addr %s321, 128
        %s323 = scalar_lea.vmem [#allocation6], %s322
        %p324 = pneg %p95
        %p325 = pneg %p92
        %p326 = scmp.lt.s32.totalorder %s30, 1
        %s327 = scalar_select %p326, %s30, 1
        %s328 = smul.addr %s327, 8
        %s329 = scalar_lea.vmem %s2, %s328
        %p330 = pneg %p121
        %p331 = pneg %p118
        %p332 = scmp.lt.s32.totalorder %s31, 1
        %s333 = scalar_select %p332, %s31, 1
        %s334 = smul.addr %s333, 8
        %s335 = scalar_lea.vmem %s3, %s334
        %p336 = pneg %p147
        %p337 = pneg %p144
        %p338 = scmp.lt.s32.totalorder %s31, 1
        %s339 = scalar_select %p338, %s31, 1
        %s340 = scalar_lea.vmem %s4, %s339
        %p341 = pneg %p173
        %p342 = pneg %p170
        %p343 = pneg %p201
        %p344 = pneg %p198
        %s345 = sand.u32 %s188, 1
        %s346 = scalar_lea.sflag [#allocation5], %s345
        %s347 = sand.u32 %s188, 1
        %s348 = smul.addr %s347, 8
        %s349 = scalar_lea.vmem [#allocation8], %s348
        %s350 = smul.u32 16, %s31
        %p351 = scmp.lt.s32.totalorder %s30, 1
        %s352 = scalar_select %p351, %s30, 1
        %s353 = smul.addr %s352, 8
        %s354 = scalar_lea.vmem %s2, %s353
        %p355 = scmp.lt.s32.totalorder %s31, 1
        %s356 = scalar_select %p355, %s31, 1
        %s357 = smul.addr %s356, 8
        %s358 = scalar_lea.vmem %s3, %s357
        %p359 = scmp.lt.s32.totalorder %s31, 1
        %s360 = scalar_select %p359, %s31, 1
        %s361 = scalar_lea.vmem %s4, %s360
        %p362 = scmp.eq.s32.totalorder %s32, 0
        // Predicated region
        $region49: #{tpu_custom_call.1} parent=39 // pred_check
          %p363 = pneg %p362
        $region50: #{tpu_custom_call.1} parent=39 // pred_check_branch
          %365 = sbr.rel (%p363) target = $region52
        $region51: #{tpu_custom_call.1} parent=39 // pred_region
          %366 = vst [vmem:[#allocation2] sm:$0xff] 0.0
        $region52: #{tpu_custom_call.1} parent=39 // pred_fallthru
          _
        %v367 = vld [vmem:[#allocation2] sm:$0xff]
        %v368 = vld [vmem:[%s296] sm:$0xff]
        %v369 = vld [vmem:[%s306] sm:$0xff]
        %v370 = vld [vmem:[%s306 + $0x8] sm:$0xff]
        %v371 = vld [vmem:[%s306 + $0x10] sm:$0xff]
        %v372 = vld [vmem:[%s306 + $0x18] sm:$0xff]
        %v373 = vld [vmem:[%s306 + $0x20] sm:$0xff]
        %v374 = vld [vmem:[%s306 + $0x28] sm:$0xff]
        %v375 = vld [vmem:[%s306 + $0x30] sm:$0xff]
        %v376 = vld [vmem:[%s306 + $0x38] sm:$0xff]
        %v377 = vld [vmem:[%s306 + $0x40] sm:$0xff]
        %v378 = vld [vmem:[%s306 + $0x48] sm:$0xff]
        %v379 = vld [vmem:[%s306 + $0x50] sm:$0xff]
        %v380 = vld [vmem:[%s306 + $0x58] sm:$0xff]
        %v381 = vld [vmem:[%s306 + $0x60] sm:$0xff]
        %v382 = vld [vmem:[%s306 + $0x68] sm:$0xff]
        %v383 = vld [vmem:[%s306 + $0x70] sm:$0xff]
        %v384 = vld [vmem:[%s306 + $0x78] sm:$0xff]
        %385 = vmatpush.xpose.msra.mxu0 %v384
        %386 = vmatpush.xpose.msra.mxu0 %v383
        %387 = vmatpush.xpose.msra.mxu0 %v382
        %388 = vmatpush.xpose.msra.mxu0 %v381
        %389 = vmatpush.xpose.msra.mxu0 %v380
        %390 = vmatpush.xpose.msra.mxu0 %v379
        %391 = vmatpush.xpose.msra.mxu0 %v378
        %392 = vmatpush.xpose.msra.mxu0 %v377
        %393 = vmatpush.xpose.msra.mxu0 %v376
        %394 = vmatpush.xpose.msra.mxu0 %v375
        %395 = vmatpush.xpose.msra.mxu0 %v374
        %396 = vmatpush.xpose.msra.mxu0 %v373
        %397 = vmatpush.xpose.msra.mxu0 %v372
        %398 = vmatpush.xpose.msra.mxu0 %v371
        %399 = vmatpush.xpose.msra.mxu0 %v370
        %400 = vmatpush.xpose.msra.mxu0 %v369
        %401 = vmatmul.f32.gmra.mxu0 %v368
        %v402 = vpop.f32.mrf.mxu0
        %v403 = vadd.f32 0.0, %v402
        %404 = vdwg.mxu0
        %v405 = vadd.f32 %v367, %v403
        %406 = vst [vmem:[#allocation2] sm:$0xff] %v405
        %p407 = scmp.eq.s32.totalorder %s32, 1
        // Predicated region
        $region53: #{tpu_custom_call.1} parent=39 // pred_check
          %p408 = pneg %p407
        $region54: #{tpu_custom_call.1} parent=39 // pred_check_branch
          %410 = sbr.rel (%p408) target = $region56
        $region55: #{tpu_custom_call.1} parent=39 // pred_region
          %v411 = vld [vmem:[%s354] sm:$0xff]
          %v412 = vld [vmem:[%s358] sm:$0xff]
          %vm413 = vcmask 64512
          %v415 = vsel %vm413, %v411, 0
          %417 = vmatpush.msra.mxu0 0.0
          %418 = vmatpush.msra.mxu0 0.0
          %419 = vmatpush.msra.mxu0 0.0
          %420 = vmatpush.msra.mxu0 0.0
          %421 = vmatpush.msra.mxu0 0.0
          %422 = vmatpush.msra.mxu0 0.0
          %423 = vmatpush.msra.mxu0 0.0
          %424 = vmatpush.msra.mxu0 0.0
          %425 = vmatpush.msra.mxu0 0.0
          %426 = vmatpush.msra.mxu0 0.0
          %427 = vmatpush.msra.mxu0 0.0
          %428 = vmatpush.msra.mxu0 0.0
          %429 = vmatpush.msra.mxu0 0.0
          %430 = vmatpush.msra.mxu0 0.0
          %431 = vmatpush.msra.mxu0 0.0
          %432 = vmatpush.msra.mxu0 %v412
          %433 = vmatmul.f32.gmra.mxu0 %v415
          %v434 = vpop.f32.mrf.mxu0
          %v435 = vadd.f32 0.0, %v434
          %436 = vdwg.mxu0
          %v437 = vld [vmem:[#allocation2] sm:$0xff]
          %v438 = vadd.f32 %v437, %v435
          %v439 = vld [vmem:[%s361] sm:$0x1]
          %v441 = vperm.slane %v439, 0
          %v443 = vadd.f32 %v438, %v441
          %444 = vst [vmem:[%s349] sm:$0xff] %v443
        $region56: #{tpu_custom_call.1} parent=39 // pred_fallthru
          _
        %s445 = sand.u32 %s188, 1
        %s446 = scalar_lea.sflag [#allocation5], %s445
        %s447 = sand.u32 %s188, 1
        %s448 = smul.addr %s447, 8
        %s449 = scalar_lea.vmem [#allocation8], %s448
        // Predicated region
        $region57: #{tpu_custom_call.1} parent=39 // pred_check
          %p450 = pneg %p198
        $region58: #{tpu_custom_call.1} parent=39 // pred_check_branch
          %452 = sbr.rel (%p450) target = $region60
        $region59: #{tpu_custom_call.1} parent=39 // pred_region
          %454 = vsyncadd %s446, 0
          %s455 = smul.addr %s30, 2
          %s456 = sadd.s32 %s31, %s455
          %s457 = smul.addr %s456, 8
          %s458 = scalar_lea.hbm %s5, %s457
          %s460 = sshll.u32 %s449, 4
          %s461 = int_to_ptr.vmem [resolvable:$true] %s460
          %s462 = sshll.u32 %s458, 4
          %s463 = int_to_ptr.hbm [resolvable:$true] %s462
          %465 = dma.vmem_to_hbm [thread:$0]  %s461, 128, %s463, %s446
        $region60: #{tpu_custom_call.1} parent=39 // pred_fallthru
          _
      $region40: #{tpu_custom_call.1} parent=5 // pred_fallthru
        _
      %p466 = scmp.le.s32.totalorder 2, %s20
      // Predicated region
      $region61: #{tpu_custom_call.1} parent=5 // pred_check
        %p467 = pneg %p466
      $region62: #{tpu_custom_call.1} parent=5 // pred_check_branch
        %469 = sbr.rel (%p467) target = $region64
      $region63: #{tpu_custom_call.1} parent=5 // pred_region
        %s470 = ssub.s32 %s20, 2
        // Predicated region
        $region65: #{tpu_custom_call.1} parent=63 // pred_check
          %p471 = pneg %p204
        $region66: #{tpu_custom_call.1} parent=63 // pred_check_branch
          %473 = sbr.rel (%p471) target = $region68
        $region67: #{tpu_custom_call.1} parent=63 // pred_region
          %s474 = sand.u32 %s189, 1
          %s475 = scalar_lea.sflag [#allocation5], %s474
          %s476 = sand.u32 %s189, 1
          %s477 = smul.addr %s476, 8
          %s478 = scalar_lea.vmem [#allocation8], %s477
          %480 = dma.done %s475, 128
        $region68: #{tpu_custom_call.1} parent=63 // pred_fallthru
          _
      $region64: #{tpu_custom_call.1} parent=5 // pred_fallthru
        _
    $region6: #{tpu_custom_call.1} parent=1 // loop_footer
      %s24 = sadd.s32 1, %s20
    $region7: #{tpu_custom_call.1} parent=1 // loop_footer_branch
      %19 = sbr.rel target = $region3
    $region8: #{tpu_custom_call.1} parent=1 // loop_exit
      _
    %481 = vsyncpa [#allocation4], 1
    %s482 = scalar_lea.sflag [#allocation4], 1
    %483 = vsyncpa %s482, 1
    %484 = vsyncpa [#allocation7], 1
    %s485 = scalar_lea.sflag [#allocation7], 1
    %486 = vsyncpa %s485, 1
    %487 = vsyncpa [#allocation5], 1
    %s488 = scalar_lea.sflag [#allocation5], 1
    %489 = vsyncpa %s488, 1

</llo_original>
